<compile_context>
chip_gen: v6e
topology: v6e:2x2x1
jax: 0.10.0
libtpu: 0.0.40
codegen_flags: <defaults>
</compile_context>

<pallas_src>
import functools

import jax
import jax.numpy as jnp
from jax.experimental import pallas as pl
from jax.experimental.pallas import tpu as pltpu

LANE = 128
SUBLANE = 8


def _round_up(x, m):
    return ((x + m - 1) // m) * m


# ---------------------------------------------------------------------------
# Fused kernel: for one (batch shard, time chunk) grid step
#   1. xp = one_hot(tokens) @ W_xh + b_h          (MXU, once per chunk)
#   2. serial recurrence h = tanh(xp[i] + h@W_hh) (bf16 MXU, f32 accumulate)
#   3. logits = Y_chunk @ W_ho + b_o              (MXU, once per chunk)
# Hidden state is carried across time chunks in VMEM scratch.
# ---------------------------------------------------------------------------
def _rnn_fused_kernel(tok_ref,            # VMEM (rows, 1) int32, rows = t_chunk*b_shard
                      h0_ref,             # VMEM (b_shard, H_pad) f32
                      wxh_ref,            # VMEM (V_pad, H_pad) f32
                      whh_ref,            # VMEM (H_pad, H_pad) bf16
                      bh_ref,             # VMEM (1, H_pad) f32
                      who_ref,            # VMEM (H_pad, V_pad) f32
                      bo_ref,             # VMEM (1, V_pad) f32
                      logits_ref,         # VMEM (t_chunk, b_shard, V_pad) f32
                      hout_ref,           # VMEM (b_shard, H_pad) f32
                      xp_scr,             # VMEM scratch (rows, H_pad) f32
                      y_scr,              # VMEM scratch (rows, H_pad) f32
                      h_scr,              # VMEM scratch (b_shard, H_pad) f32
                      *, t_chunk, b_shard, seq_len, mask_tail):
    c = pl.program_id(1)                  # time chunk (sequential carry)
    v_pad, h_pad = wxh_ref.shape
    rows = t_chunk * b_shard

    @pl.when(c == 0)
    def _():
        h_scr[...] = h0_ref[...]

    # ---- hoisted input projection for the whole chunk (off the serial chain) ----
    tok_col = tok_ref[...]                                            # (rows, 1) int32
    iota_v = jax.lax.broadcasted_iota(jnp.int32, (rows, v_pad), 1)
    one_hot = (tok_col == iota_v).astype(jnp.float32)                 # (rows, V_pad)
    xp_scr[...] = (
        jnp.dot(one_hot, wxh_ref[...], preferred_element_type=jnp.float32)
        + bh_ref[...]
    )

    whh = whh_ref[...]                    # bf16 weights for the recurrence matmul

    def step(i, h_prev):
        base = pl.multiple_of(i * b_shard, b_shard)
        h_new = jnp.tanh(
            xp_scr[pl.ds(base, b_shard), :]
            + jnp.dot(h_prev.astype(whh.dtype), whh,
                      preferred_element_type=jnp.float32)
        )
        y_scr[pl.ds(base, b_shard), :] = h_new
        return h_new

    if mask_tail:
        # Dynamic trip count: padded tail timesteps are skipped entirely
        # (only the last chunk is partial; earlier chunks filled y_scr fully).
        valid = jnp.minimum(t_chunk, seq_len - c * t_chunk)
        h_last = jax.lax.fori_loop(0, valid, step, h_scr[...])
    else:
        unroll = True if t_chunk <= 16 else 8
        h_last = jax.lax.fori_loop(0, t_chunk, step, h_scr[...], unroll=unroll)
    h_scr[...] = h_last

    # ---- fused output head: no Y round trip through HBM ----
    logits = (
        jnp.dot(y_scr[...], who_ref[...], preferred_element_type=jnp.float32)
        + bo_ref[...]
    )
    logits_ref[...] = logits.reshape(t_chunk, b_shard, v_pad)

    @pl.when(c == pl.num_programs(1) - 1)
    def _():
        hout_ref[...] = h_last


# ---------------------------------------------------------------------------
# Parameter preparation (done once): pad to (8,128)-friendly shapes, transpose
# the Linear weight, fold b_ih + b_hh, cast W_hh to bf16 for the MXU.
# ---------------------------------------------------------------------------
def prepare_params(params, recurrence_dtype=jnp.bfloat16):
    vocab, hidden = params["W_xh"].shape
    v_pad = _round_up(vocab, LANE)
    h_pad = _round_up(hidden, LANE)
    wxh = jnp.zeros((v_pad, h_pad), jnp.float32).at[:vocab, :hidden].set(params["W_xh"])
    whh = jnp.zeros((h_pad, h_pad), jnp.float32).at[:hidden, :hidden].set(
        params["W_hh"]).astype(recurrence_dtype)
    bh = jnp.zeros((1, h_pad), jnp.float32).at[0, :hidden].set(
        params["b_ih"] + params["b_hh"])
    who = jnp.zeros((h_pad, v_pad), jnp.float32).at[:hidden, :vocab].set(
        params["W_out"].T)
    bo = jnp.zeros((1, v_pad), jnp.float32).at[0, :vocab].set(params["b_out"])
    return {"W_xh": wxh, "W_hh": whh, "b_h": bh, "W_ho": who, "b_o": bo,
            "vocab": vocab, "hidden": hidden}


def rnn_model_forward(inputs, state, prep, *, max_batch_shard=256, max_time_chunk=128):
    """inputs: (batch, seq) int token ids; state: (1, batch, hidden) f32."""
    v_pad, h_pad = prep["W_xh"].shape
    vocab, hidden = prep["vocab"], prep["hidden"]
    batch, seq_len = inputs.shape

    b_shard = min(_round_up(batch, SUBLANE), max_batch_shard)
    batch_pad = _round_up(batch, b_shard)
    num_shards = batch_pad // b_shard

    t_chunk = seq_len if seq_len <= max_time_chunk else max_time_chunk
    num_chunks = pl.cdiv(seq_len, t_chunk)
    seq_pad = num_chunks * t_chunk
    mask_tail = seq_pad != seq_len
    rows = t_chunk * b_shard

    # Token ids rearranged to (shard, chunk, t, b) order and flattened so each
    # grid step DMAs only its own small (rows, 1) int32 block into VMEM.
    tok = jnp.zeros((seq_pad, batch_pad), jnp.int32)
    tok = tok.at[:seq_len, :batch].set(inputs.T.astype(jnp.int32))
    tok = tok.reshape(num_chunks, t_chunk, num_shards, b_shard)
    tok = jnp.transpose(tok, (2, 0, 1, 3)).reshape(num_shards * num_chunks * rows, 1)

    h0 = jnp.zeros((batch_pad, h_pad), jnp.float32)
    h0 = h0.at[:batch, :hidden].set(state[0])

    kernel = functools.partial(
        _rnn_fused_kernel, t_chunk=t_chunk, b_shard=b_shard,
        seq_len=seq_len, mask_tail=mask_tail)

    logits_pad, h_final = pl.pallas_call(
        kernel,
        out_shape=(
            jax.ShapeDtypeStruct((seq_pad, batch_pad, v_pad), jnp.float32),
            jax.ShapeDtypeStruct((batch_pad, h_pad), jnp.float32),
        ),
        grid_spec=pltpu.PrefetchScalarGridSpec(
            num_scalar_prefetch=0,
            grid=(num_shards, num_chunks),
            in_specs=[
                pl.BlockSpec((rows, 1), lambda s, c: (s * num_chunks + c, 0)),  # tokens
                pl.BlockSpec((b_shard, h_pad), lambda s, c: (s, 0)),            # h0
                pl.BlockSpec((v_pad, h_pad), lambda s, c: (0, 0)),              # W_xh
                pl.BlockSpec((h_pad, h_pad), lambda s, c: (0, 0)),              # W_hh (bf16)
                pl.BlockSpec((1, h_pad), lambda s, c: (0, 0)),                  # b_h
                pl.BlockSpec((h_pad, v_pad), lambda s, c: (0, 0)),              # W_ho
                pl.BlockSpec((1, v_pad), lambda s, c: (0, 0)),                  # b_o
            ],
            out_specs=[
                pl.BlockSpec((t_chunk, b_shard, v_pad), lambda s, c: (c, s, 0)),  # logits
                pl.BlockSpec((b_shard, h_pad), lambda s, c: (s, 0)),              # h_T
            ],
            scratch_shapes=[
                pltpu.VMEM((rows, h_pad), jnp.float32),      # xp (input proj + bias)
                pltpu.VMEM((rows, h_pad), jnp.float32),      # Y for the chunk
                pltpu.VMEM((b_shard, h_pad), jnp.float32),   # carried hidden state
            ],
        ),
        compiler_params=pltpu.CompilerParams(
            # batch shards are independent (megacore on v7x); time is sequential.
            dimension_semantics=("parallel", "arbitrary"),
        ),
    )(tok, h0, prep["W_xh"], prep["W_hh"], prep["b_h"], prep["W_ho"], prep["b_o"])

    logits = logits_pad[:seq_len, :batch, :vocab]
    output = logits.reshape(seq_len * batch, vocab)     # = Linear(Y.reshape(-1, H))
    new_state = h_final[:batch, :hidden][None, :, :]    # (1, batch, hidden)
    return output, new_state


# ---------------------------------------------------------------------------
# Raw (unpadded) parameters + pure-JAX f32 reference, matching the PyTorch module.
# ---------------------------------------------------------------------------
def init_params(key, vocab_size, num_hiddens):
    k = jax.random.split(key, 6)
    s = 1.0 / jnp.sqrt(jnp.float32(num_hiddens))
    u = lambda kk, shape: jax.random.uniform(kk, shape, jnp.float32, -s, s)
    return {
        "W_xh": u(k[0], (vocab_size, num_hiddens)),   # == nn.RNN weight_ih_l0.T
        "W_hh": u(k[1], (num_hiddens, num_hiddens)),  # == nn.RNN weight_hh_l0.T
        "b_ih": u(k[2], (num_hiddens,)),
        "b_hh": u(k[3], (num_hiddens,)),
        "W_out": u(k[4], (vocab_size, num_hiddens)),  # nn.Linear weight (V, H)
        "b_out": u(k[5], (vocab_size,)),
    }


def begin_state(batch_size, num_hiddens, num_layers=1, num_directions=1):
    return jnp.zeros((num_directions * num_layers, batch_size, num_hiddens),
                     jnp.float32)


def rnn_model_reference(inputs, state, params):
    vocab = params["W_xh"].shape[0]
    x = jax.nn.one_hot(inputs.T, vocab, dtype=jnp.float32)   # (seq, batch, vocab)
    h = state[0]
    bh = params["b_ih"] + params["b_hh"]
    ys = []
    for t in range(x.shape[0]):
        h = jnp.tanh(x[t] @ params["W_xh"] + h @ params["W_hh"] + bh)
        ys.append(h)
    y = jnp.stack(ys)                                        # (seq, batch, hidden)
    out = y.reshape(-1, y.shape[-1]) @ params["W_out"].T + params["b_out"]
    return out, h[None, :, :]


if __name__ == "__main__":
    vocab_size = 32
    num_hiddens = 32
    batch = 2
    seq = 8

    key = jax.random.PRNGKey(0)
    pkey, ikey = jax.random.split(key)
    params = init_params(pkey, vocab_size, num_hiddens)
    prep = prepare_params(params)

    inputs = jax.random.randint(ikey, (batch, seq), 0, vocab_size, dtype=jnp.int32)
    state = begin_state(batch, num_hiddens)

    output, new_state = rnn_model_forward(inputs, state, prep)
    jax.block_until_ready((output, new_state))

    assert output.shape == (seq * batch, vocab_size)
    assert new_state.shape == (1, batch, num_hiddens)

    out_ref, state_ref = rnn_model_reference(inputs, state, params)
    # Recurrence matmul runs in bf16 (f32 accumulation) -> loosened tolerance.
    assert float(jnp.max(jnp.abs(output - out_ref))) < 2e-2
    assert float(jnp.max(jnp.abs(new_state - state_ref))) < 2e-2

    print("KERNEL_OK")
</pallas_src>

<mosaic_0001>
module attributes {stable_mosaic.version = 11 : i64} {
  func.func @_rnn_fused_kernel(%arg0: i32, %arg1: i32, %arg2: memref<64x1xi32, #tpu.memory_space<vmem>>, %arg3: memref<8x128xf32, #tpu.memory_space<vmem>>, %arg4: memref<128x128xf32, #tpu.memory_space<vmem>>, %arg5: memref<128x128xbf16, #tpu.memory_space<vmem>>, %arg6: memref<1x128xf32, #tpu.memory_space<vmem>>, %arg7: memref<128x128xf32, #tpu.memory_space<vmem>>, %arg8: memref<1x128xf32, #tpu.memory_space<vmem>>, %arg9: memref<8x8x128xf32, #tpu.memory_space<vmem>>, %arg10: memref<8x128xf32, #tpu.memory_space<vmem>>, %arg11: memref<64x128xf32, #tpu.memory_space<vmem>>, %arg12: memref<64x128xf32, #tpu.memory_space<vmem>>, %arg13: memref<8x128xf32, #tpu.memory_space<vmem>>) attributes {dimension_semantics = [#tpu.dimension_semantics<parallel>, #tpu.dimension_semantics<arbitrary>], iteration_bounds = array<i64: 1, 1>, scalar_prefetch = 0 : i64, scratch_operands = 3 : i64, tpu.core_type = #tpu.core_type<tc>, window_params = [{transform_indices = @transform_0, window_bounds = array<i64: 64, 1>}, {transform_indices = @transform_1, window_bounds = array<i64: 8, 128>}, {pipeline_mode = #tpu.pipeline_mode<synchronous>, transform_indices = @transform_2, window_bounds = array<i64: 128, 128>}, {pipeline_mode = #tpu.pipeline_mode<synchronous>, transform_indices = @transform_3, window_bounds = array<i64: 128, 128>}, {pipeline_mode = #tpu.pipeline_mode<synchronous>, transform_indices = @transform_4, window_bounds = array<i64: 1, 128>}, {pipeline_mode = #tpu.pipeline_mode<synchronous>, transform_indices = @transform_5, window_bounds = array<i64: 128, 128>}, {pipeline_mode = #tpu.pipeline_mode<synchronous>, transform_indices = @transform_6, window_bounds = array<i64: 1, 128>}, {transform_indices = @transform_7, window_bounds = array<i64: 8, 8, 128>}, {transform_indices = @transform_8, window_bounds = array<i64: 8, 128>}]} {
    %c0_i32 = arith.constant 0 : i32
    %0 = arith.cmpi eq, %arg1, %c0_i32 : i32
    %1 = arith.extui %0 : i1 to i32
    %c0_i32_0 = arith.constant 0 : i32
    %2 = arith.cmpi ne, %1, %c0_i32_0 : i32
    scf.if %2 {
      %c0_59 = arith.constant 0 : index
      %c0_60 = arith.constant 0 : index
      %109 = vector.load %arg3[%c0_59, %c0_60] : memref<8x128xf32, #tpu.memory_space<vmem>>, vector<8x128xf32>
      %c0_61 = arith.constant 0 : index
      %c0_62 = arith.constant 0 : index
      %110 = vector.load %arg13[%c0_61, %c0_62] : memref<8x128xf32, #tpu.memory_space<vmem>>, vector<8x128xf32>
      tpu.vector_store %arg13[%c0_61, %c0_62], %109 {strides = array<i32>} : memref<8x128xf32, #tpu.memory_space<vmem>>, vector<8x128xf32>,
    } else {
    }
    %c0 = arith.constant 0 : index
    %c0_1 = arith.constant 0 : index
    %3 = vector.load %arg2[%c0, %c0_1] : memref<64x1xi32, #tpu.memory_space<vmem>>, vector<64x1xi32>
    %4 = tpu.iota {dimensions = array<i32: 1>} : vector<64x128xi32>
    %5 = vector.broadcast %3 : vector<64x1xi32> to vector<64x128xi32>
    %6 = arith.cmpi eq, %5, %4 : vector<64x128xi32>
    %7 = arith.extui %6 : vector<64x128xi1> to vector<64x128xi32>
    %8 = arith.sitofp %7 : vector<64x128xi32> to vector<64x128xf32>
    %c0_2 = arith.constant 0 : index
    %c0_3 = arith.constant 0 : index
    %9 = vector.load %arg4[%c0_2, %c0_3] : memref<128x128xf32, #tpu.memory_space<vmem>>, vector<128x128xf32>
    %cst = arith.constant dense<0.000000e+00> : vector<64x128xf32>
    %10 = tpu.matmul %8, %9, %cst {dimension_numbers = #tpu.dot_dimension_numbers<[1], [0], [0], [1], [0, 0, 1, 1], [], []>} : vector<64x128xf32>, vector<128x128xf32>, vector<64x128xf32> -> vector<64x128xf32>
    %c0_4 = arith.constant 0 : index
    %c0_5 = arith.constant 0 : index
    %11 = vector.load %arg6[%c0_4, %c0_5] : memref<1x128xf32, #tpu.memory_space<vmem>>, vector<1x128xf32>
    %12 = vector.broadcast %11 : vector<1x128xf32> to vector<64x128xf32>
    %13 = arith.addf %10, %12 : vector<64x128xf32>
    %c0_6 = arith.constant 0 : index
    %c0_7 = arith.constant 0 : index
    %14 = vector.load %arg11[%c0_6, %c0_7] : memref<64x128xf32, #tpu.memory_space<vmem>>, vector<64x128xf32>
    tpu.vector_store %arg11[%c0_6, %c0_7], %13 {strides = array<i32>} : memref<64x128xf32, #tpu.memory_space<vmem>>, vector<64x128xf32>,
    %c0_8 = arith.constant 0 : index
    %c0_9 = arith.constant 0 : index
    %15 = vector.load %arg5[%c0_8, %c0_9] : memref<128x128xbf16, #tpu.memory_space<vmem>>, vector<128x128xbf16>
    %c0_10 = arith.constant 0 : index
    %c0_11 = arith.constant 0 : index
    %16 = vector.load %arg13[%c0_10, %c0_11] : memref<8x128xf32, #tpu.memory_space<vmem>>, vector<8x128xf32>
    %c0_i32_12 = arith.constant 0 : i32
    %c8_i32 = arith.constant 8 : i32
    %17 = arith.muli %c0_i32_12, %c8_i32 : i32
    %18 = tpu.assume_multiple %17, 8 : i32
    %19 = arith.index_cast %18 : i32 to index
    %c0_13 = arith.constant 0 : index
    %20 = vector.load %arg11[%19, %c0_13] : memref<64x128xf32, #tpu.memory_space<vmem>>, vector<8x128xf32>
    %21 = arith.truncf %16 : vector<8x128xf32> to vector<8x128xbf16>
    %cst_14 = arith.constant dense<0.000000e+00> : vector<8x128xf32>
    %22 = tpu.matmul %21, %15, %cst_14 {dimension_numbers = #tpu.dot_dimension_numbers<[1], [0], [0], [1], [0, 0, 1, 1], [], []>} : vector<8x128xbf16>, vector<128x128xbf16>, vector<8x128xf32> -> vector<8x128xf32>
    %23 = arith.addf %20, %22 : vector<8x128xf32>
    %24 = math.tanh %23 : vector<8x128xf32>
    %25 = arith.index_cast %18 : i32 to index
    %c0_15 = arith.constant 0 : index
    %26 = vector.load %arg12[%25, %c0_15] : memref<64x128xf32, #tpu.memory_space<vmem>>, vector<8x128xf32>
    tpu.vector_store %arg12[%25, %c0_15], %24 {strides = array<i32>} : memref<64x128xf32, #tpu.memory_space<vmem>>, vector<8x128xf32>,
    %c1_i32 = arith.constant 1 : i32
    %c8_i32_16 = arith.constant 8 : i32
    %27 = arith.muli %c1_i32, %c8_i32_16 : i32
    %28 = tpu.assume_multiple %27, 8 : i32
    %29 = arith.index_cast %28 : i32 to index
    %c0_17 = arith.constant 0 : index
    %30 = vector.load %arg11[%29, %c0_17] : memref<64x128xf32, #tpu.memory_space<vmem>>, vector<8x128xf32>
    %31 = arith.truncf %24 : vector<8x128xf32> to vector<8x128xbf16>
    %cst_18 = arith.constant dense<0.000000e+00> : vector<8x128xf32>
    %32 = tpu.matmul %31, %15, %cst_18 {dimension_numbers = #tpu.dot_dimension_numbers<[1], [0], [0], [1], [0, 0, 1, 1], [], []>} : vector<8x128xbf16>, vector<128x128xbf16>, vector<8x128xf32> -> vector<8x128xf32>
    %33 = arith.addf %30, %32 : vector<8x128xf32>
    %34 = math.tanh %33 : vector<8x128xf32>
    %35 = arith.index_cast %28 : i32 to index
    %c0_19 = arith.constant 0 : index
    %36 = vector.load %arg12[%35, %c0_19] : memref<64x128xf32, #tpu.memory_space<vmem>>, vector<8x128xf32>
    tpu.vector_store %arg12[%35, %c0_19], %34 {strides = array<i32>} : memref<64x128xf32, #tpu.memory_space<vmem>>, vector<8x128xf32>,
    %c2_i32 = arith.constant 2 : i32
    %c8_i32_20 = arith.constant 8 : i32
    %37 = arith.muli %c2_i32, %c8_i32_20 : i32
    %38 = tpu.assume_multiple %37, 8 : i32
    %39 = arith.index_cast %38 : i32 to index
    %c0_21 = arith.constant 0 : index
    %40 = vector.load %arg11[%39, %c0_21] : memref<64x128xf32, #tpu.memory_space<vmem>>, vector<8x128xf32>
    %41 = arith.truncf %34 : vector<8x128xf32> to vector<8x128xbf16>
    %cst_22 = arith.constant dense<0.000000e+00> : vector<8x128xf32>
    %42 = tpu.matmul %41, %15, %cst_22 {dimension_numbers = #tpu.dot_dimension_numbers<[1], [0], [0], [1], [0, 0, 1, 1], [], []>} : vector<8x128xbf16>, vector<128x128xbf16>, vector<8x128xf32> -> vector<8x128xf32>
    %43 = arith.addf %40, %42 : vector<8x128xf32>
    %44 = math.tanh %43 : vector<8x128xf32>
    %45 = arith.index_cast %38 : i32 to index
    %c0_23 = arith.constant 0 : index
    %46 = vector.load %arg12[%45, %c0_23] : memref<64x128xf32, #tpu.memory_space<vmem>>, vector<8x128xf32>
    tpu.vector_store %arg12[%45, %c0_23], %44 {strides = array<i32>} : memref<64x128xf32, #tpu.memory_space<vmem>>, vector<8x128xf32>,
    %c3_i32 = arith.constant 3 : i32
    %c8_i32_24 = arith.constant 8 : i32
    %47 = arith.muli %c3_i32, %c8_i32_24 : i32
    %48 = tpu.assume_multiple %47, 8 : i32
    %49 = arith.index_cast %48 : i32 to index
    %c0_25 = arith.constant 0 : index
    %50 = vector.load %arg11[%49, %c0_25] : memref<64x128xf32, #tpu.memory_space<vmem>>, vector<8x128xf32>
    %51 = arith.truncf %44 : vector<8x128xf32> to vector<8x128xbf16>
    %cst_26 = arith.constant dense<0.000000e+00> : vector<8x128xf32>
    %52 = tpu.matmul %51, %15, %cst_26 {dimension_numbers = #tpu.dot_dimension_numbers<[1], [0], [0], [1], [0, 0, 1, 1], [], []>} : vector<8x128xbf16>, vector<128x128xbf16>, vector<8x128xf32> -> vector<8x128xf32>
    %53 = arith.addf %50, %52 : vector<8x128xf32>
    %54 = math.tanh %53 : vector<8x128xf32>
    %55 = arith.index_cast %48 : i32 to index
    %c0_27 = arith.constant 0 : index
    %56 = vector.load %arg12[%55, %c0_27] : memref<64x128xf32, #tpu.memory_space<vmem>>, vector<8x128xf32>
    tpu.vector_store %arg12[%55, %c0_27], %54 {strides = array<i32>} : memref<64x128xf32, #tpu.memory_space<vmem>>, vector<8x128xf32>,
    %c4_i32 = arith.constant 4 : i32
    %c8_i32_28 = arith.constant 8 : i32
    %57 = arith.muli %c4_i32, %c8_i32_28 : i32
    %58 = tpu.assume_multiple %57, 8 : i32
    %59 = arith.index_cast %58 : i32 to index
    %c0_29 = arith.constant 0 : index
    %60 = vector.load %arg11[%59, %c0_29] : memref<64x128xf32, #tpu.memory_space<vmem>>, vector<8x128xf32>
    %61 = arith.truncf %54 : vector<8x128xf32> to vector<8x128xbf16>
    %cst_30 = arith.constant dense<0.000000e+00> : vector<8x128xf32>
    %62 = tpu.matmul %61, %15, %cst_30 {dimension_numbers = #tpu.dot_dimension_numbers<[1], [0], [0], [1], [0, 0, 1, 1], [], []>} : vector<8x128xbf16>, vector<128x128xbf16>, vector<8x128xf32> -> vector<8x128xf32>
    %63 = arith.addf %60, %62 : vector<8x128xf32>
    %64 = math.tanh %63 : vector<8x128xf32>
    %65 = arith.index_cast %58 : i32 to index
    %c0_31 = arith.constant 0 : index
    %66 = vector.load %arg12[%65, %c0_31] : memref<64x128xf32, #tpu.memory_space<vmem>>, vector<8x128xf32>
    tpu.vector_store %arg12[%65, %c0_31], %64 {strides = array<i32>} : memref<64x128xf32, #tpu.memory_space<vmem>>, vector<8x128xf32>,
    %c5_i32 = arith.constant 5 : i32
    %c8_i32_32 = arith.constant 8 : i32
    %67 = arith.muli %c5_i32, %c8_i32_32 : i32
    %68 = tpu.assume_multiple %67, 8 : i32
    %69 = arith.index_cast %68 : i32 to index
    %c0_33 = arith.constant 0 : index
    %70 = vector.load %arg11[%69, %c0_33] : memref<64x128xf32, #tpu.memory_space<vmem>>, vector<8x128xf32>
    %71 = arith.truncf %64 : vector<8x128xf32> to vector<8x128xbf16>
    %cst_34 = arith.constant dense<0.000000e+00> : vector<8x128xf32>
    %72 = tpu.matmul %71, %15, %cst_34 {dimension_numbers = #tpu.dot_dimension_numbers<[1], [0], [0], [1], [0, 0, 1, 1], [], []>} : vector<8x128xbf16>, vector<128x128xbf16>, vector<8x128xf32> -> vector<8x128xf32>
    %73 = arith.addf %70, %72 : vector<8x128xf32>
    %74 = math.tanh %73 : vector<8x128xf32>
    %75 = arith.index_cast %68 : i32 to index
    %c0_35 = arith.constant 0 : index
    %76 = vector.load %arg12[%75, %c0_35] : memref<64x128xf32, #tpu.memory_space<vmem>>, vector<8x128xf32>
    tpu.vector_store %arg12[%75, %c0_35], %74 {strides = array<i32>} : memref<64x128xf32, #tpu.memory_space<vmem>>, vector<8x128xf32>,
    %c6_i32 = arith.constant 6 : i32
    %c8_i32_36 = arith.constant 8 : i32
    %77 = arith.muli %c6_i32, %c8_i32_36 : i32
    %78 = tpu.assume_multiple %77, 8 : i32
    %79 = arith.index_cast %78 : i32 to index
    %c0_37 = arith.constant 0 : index
    %80 = vector.load %arg11[%79, %c0_37] : memref<64x128xf32, #tpu.memory_space<vmem>>, vector<8x128xf32>
    %81 = arith.truncf %74 : vector<8x128xf32> to vector<8x128xbf16>
    %cst_38 = arith.constant dense<0.000000e+00> : vector<8x128xf32>
    %82 = tpu.matmul %81, %15, %cst_38 {dimension_numbers = #tpu.dot_dimension_numbers<[1], [0], [0], [1], [0, 0, 1, 1], [], []>} : vector<8x128xbf16>, vector<128x128xbf16>, vector<8x128xf32> -> vector<8x128xf32>
    %83 = arith.addf %80, %82 : vector<8x128xf32>
    %84 = math.tanh %83 : vector<8x128xf32>
    %85 = arith.index_cast %78 : i32 to index
    %c0_39 = arith.constant 0 : index
    %86 = vector.load %arg12[%85, %c0_39] : memref<64x128xf32, #tpu.memory_space<vmem>>, vector<8x128xf32>
    tpu.vector_store %arg12[%85, %c0_39], %84 {strides = array<i32>} : memref<64x128xf32, #tpu.memory_space<vmem>>, vector<8x128xf32>,
    %c7_i32 = arith.constant 7 : i32
    %c8_i32_40 = arith.constant 8 : i32
    %87 = arith.muli %c7_i32, %c8_i32_40 : i32
    %88 = tpu.assume_multiple %87, 8 : i32
    %89 = arith.index_cast %88 : i32 to index
    %c0_41 = arith.constant 0 : index
    %90 = vector.load %arg11[%89, %c0_41] : memref<64x128xf32, #tpu.memory_space<vmem>>, vector<8x128xf32>
    %91 = arith.truncf %84 : vector<8x128xf32> to vector<8x128xbf16>
    %cst_42 = arith.constant dense<0.000000e+00> : vector<8x128xf32>
    %92 = tpu.matmul %91, %15, %cst_42 {dimension_numbers = #tpu.dot_dimension_numbers<[1], [0], [0], [1], [0, 0, 1, 1], [], []>} : vector<8x128xbf16>, vector<128x128xbf16>, vector<8x128xf32> -> vector<8x128xf32>
    %93 = arith.addf %90, %92 : vector<8x128xf32>
    %94 = math.tanh %93 : vector<8x128xf32>
    %95 = arith.index_cast %88 : i32 to index
    %c0_43 = arith.constant 0 : index
    %96 = vector.load %arg12[%95, %c0_43] : memref<64x128xf32, #tpu.memory_space<vmem>>, vector<8x128xf32>
    tpu.vector_store %arg12[%95, %c0_43], %94 {strides = array<i32>} : memref<64x128xf32, #tpu.memory_space<vmem>>, vector<8x128xf32>,
    %c8_i32_44 = arith.constant 8 : i32
    %c0_45 = arith.constant 0 : index
    %c0_46 = arith.constant 0 : index
    %97 = vector.load %arg13[%c0_45, %c0_46] : memref<8x128xf32, #tpu.memory_space<vmem>>, vector<8x128xf32>
    tpu.vector_store %arg13[%c0_45, %c0_46], %94 {strides = array<i32>} : memref<8x128xf32, #tpu.memory_space<vmem>>, vector<8x128xf32>,
    %c0_47 = arith.constant 0 : index
    %c0_48 = arith.constant 0 : index
    %98 = vector.load %arg12[%c0_47, %c0_48] : memref<64x128xf32, #tpu.memory_space<vmem>>, vector<64x128xf32>
    %c0_49 = arith.constant 0 : index
    %c0_50 = arith.constant 0 : index
    %99 = vector.load %arg7[%c0_49, %c0_50] : memref<128x128xf32, #tpu.memory_space<vmem>>, vector<128x128xf32>
    %cst_51 = arith.constant dense<0.000000e+00> : vector<64x128xf32>
    %100 = tpu.matmul %98, %99, %cst_51 {dimension_numbers = #tpu.dot_dimension_numbers<[1], [0], [0], [1], [0, 0, 1, 1], [], []>} : vector<64x128xf32>, vector<128x128xf32>, vector<64x128xf32> -> vector<64x128xf32>
    %c0_52 = arith.constant 0 : index
    %c0_53 = arith.constant 0 : index
    %101 = vector.load %arg8[%c0_52, %c0_53] : memref<1x128xf32, #tpu.memory_space<vmem>>, vector<1x128xf32>
    %102 = vector.broadcast %101 : vector<1x128xf32> to vector<64x128xf32>
    %103 = arith.addf %100, %102 : vector<64x128xf32>
    %104 = vector.shape_cast %103 : vector<64x128xf32> to vector<8x8x128xf32>
    %c0_54 = arith.constant 0 : index
    %c0_55 = arith.constant 0 : index
    %c0_56 = arith.constant 0 : index
    %105 = vector.load %arg9[%c0_54, %c0_55, %c0_56] : memref<8x8x128xf32, #tpu.memory_space<vmem>>, vector<8x8x128xf32>
    tpu.vector_store %arg9[%c0_54, %c0_55, %c0_56], %104 {strides = array<i32>} : memref<8x8x128xf32, #tpu.memory_space<vmem>>, vector<8x8x128xf32>,
    %c0_i32_57 = arith.constant 0 : i32
    %106 = arith.cmpi eq, %arg1, %c0_i32_57 : i32
    %107 = arith.extui %106 : i1 to i32
    %c0_i32_58 = arith.constant 0 : i32
    %108 = arith.cmpi ne, %107, %c0_i32_58 : i32
    scf.if %108 {
      %c0_59 = arith.constant 0 : index
      %c0_60 = arith.constant 0 : index
      %109 = vector.load %arg10[%c0_59, %c0_60] : memref<8x128xf32, #tpu.memory_space<vmem>>, vector<8x128xf32>
      tpu.vector_store %arg10[%c0_59, %c0_60], %94 {strides = array<i32>} : memref<8x128xf32, #tpu.memory_space<vmem>>, vector<8x128xf32>,
    } else {
    }
    return
  }
  func.func @transform_0(%arg0: i32, %arg1: i32) -> (i32, i32) {
    %c1_i32 = arith.constant 1 : i32
    %0 = arith.muli %arg0, %c1_i32 : i32
    %1 = arith.addi %0, %arg1 : i32
    %c0_i32 = arith.constant 0 : i32
    %c0_i32_0 = arith.constant 0 : i32
    return %1, %c0_i32 : i32, i32
  }
  func.func @transform_1(%arg0: i32, %arg1: i32) -> (i32, i32) {
    %c0_i32 = arith.constant 0 : i32
    %c0_i32_0 = arith.constant 0 : i32
    return %arg0, %c0_i32 : i32, i32
  }
  func.func @transform_2(%arg0: i32, %arg1: i32) -> (i32, i32) {
    %c0_i32 = arith.constant 0 : i32
    %c0_i32_0 = arith.constant 0 : i32
    %c0_i32_1 = arith.constant 0 : i32
    return %c0_i32, %c0_i32_0 : i32, i32
  }
  func.func @transform_3(%arg0: i32, %arg1: i32) -> (i32, i32) {
    %c0_i32 = arith.constant 0 : i32
    %c0_i32_0 = arith.constant 0 : i32
    %c0_i32_1 = arith.constant 0 : i32
    return %c0_i32, %c0_i32_0 : i32, i32
  }
  func.func @transform_4(%arg0: i32, %arg1: i32) -> (i32, i32) {
    %c0_i32 = arith.constant 0 : i32
    %c0_i32_0 = arith.constant 0 : i32
    %c0_i32_1 = arith.constant 0 : i32
    return %c0_i32, %c0_i32_0 : i32, i32
  }
  func.func @transform_5(%arg0: i32, %arg1: i32) -> (i32, i32) {
    %c0_i32 = arith.constant 0 : i32
    %c0_i32_0 = arith.constant 0 : i32
    %c0_i32_1 = arith.constant 0 : i32
    return %c0_i32, %c0_i32_0 : i32, i32
  }
  func.func @transform_6(%arg0: i32, %arg1: i32) -> (i32, i32) {
    %c0_i32 = arith.constant 0 : i32
    %c0_i32_0 = arith.constant 0 : i32
    %c0_i32_1 = arith.constant 0 : i32
    return %c0_i32, %c0_i32_0 : i32, i32
  }
  func.func @transform_7(%arg0: i32, %arg1: i32) -> (i32, i32, i32) {
    %c0_i32 = arith.constant 0 : i32
    %c0_i32_0 = arith.constant 0 : i32
    return %arg1, %arg0, %c0_i32 : i32, i32, i32
  }
  func.func @transform_8(%arg0: i32, %arg1: i32) -> (i32, i32) {
    %c0_i32 = arith.constant 0 : i32
    %c0_i32_0 = arith.constant 0 : i32
    return %arg0, %c0_i32 : i32, i32
  }
}

</mosaic_0001>

<llo_original>
// kernel: tpu_custom_call.1
$region0: #{tpu_custom_call.1}
  #allocation0 [shape = 'u32[]', space=smem, size = 0x4, offset = 0x4, fixed_abs, tag = 'smem constant byte address 0x4 - core index']
  #allocation1 [shape = 'u32[144,128]{1,0:T(1,128)}', space=vmem, size = 0x12000, scoped, tag = 'internal scratch']
  #allocation2 [shape = 'f32[64,128]{1,0:T(8,128)}', space=vmem, size = 0x8000, scoped, tag = 'scratch operand']
  #allocation3 [shape = 'f32[64,128]{1,0:T(8,128)}', space=vmem, size = 0x8000, scoped, tag = 'scratch operand']
  #allocation4 [shape = 'f32[8,128]{1,0:T(8,128)}', space=vmem, size = 0x1000, scoped, tag = 'scratch operand']
  %s0 = inlined_call_operand.vmem [shape: s32[64,1], index: 0, kind: input, shape index: {}]
  %s1 = inlined_call_operand.hbm [shape: f32[8,128], index: 1, kind: input, shape index: {}]
  %s2 = inlined_call_operand.hbm [shape: f32[128,128], index: 2, kind: input, shape index: {}]
  %s3 = inlined_call_operand.vmem [shape: bf16[128,128], index: 3, kind: input, shape index: {}]
  %s4 = inlined_call_operand.vmem [shape: f32[1,128], index: 4, kind: input, shape index: {}]
  %s5 = inlined_call_operand.hbm [shape: f32[128,128], index: 5, kind: input, shape index: {}]
  %s6 = inlined_call_operand.vmem [shape: f32[1,128], index: 6, kind: input, shape index: {}]
  %s7 = inlined_call_operand.hbm [shape: f32[8,8,128], index: 7, kind: output, shape index: {0}]
  %s8 = inlined_call_operand.hbm [shape: f32[8,128], index: 8, kind: output, shape index: {1}]
  %9 = xla_tuple %s7, %s8
  %s10 = sld [smem:[#allocation0]]
  $region66: #{tpu_custom_call.1} parent=0
    _
  %s12 = ssub.s32 1, %s10
  %s13 = scalar_select 0, %s12, %s10
  $region1: #{tpu_custom_call.1} parent=0
    #allocation5 [shape = 'u8[4096]{0}', space=vmem, size = 0x1000, scoped, tag = 'input window, operand 1, single buffered']
    #allocation6 [shape = 's32[1]{0}', space=sflag, size = 0x4, scoped, tag = 'scoped memory for tpu_custom_call.1']
    #allocation7 [shape = 's32[1]{0}', space=sflag, size = 0x4, scoped, tag = 'scoped memory for tpu_custom_call.1']
    #allocation8 [shape = 'u8[65536]{0}', space=vmem, size = 0x10000, scoped, tag = 'input window, operand 2, single buffered']
    #allocation9 [shape = 's32[1]{0}', space=sflag, size = 0x4, scoped, tag = 'scoped memory for tpu_custom_call.1']
    #allocation10 [shape = 'u8[65536]{0}', space=vmem, size = 0x10000, scoped, tag = 'input window, operand 5, single buffered']
    #allocation11 [shape = 'u8[32768]{0}', space=vmem, size = 0x8000, scoped, tag = 'output window, operand 0, single buffered']
    #allocation12 [shape = 'u8[4096]{0}', space=vmem, size = 0x1000, scoped, tag = 'output window, operand 1, single buffered']
    #allocation13 [shape = 's32[1]{0}', space=sflag, size = 0x4, scoped, tag = 'scoped memory for tpu_custom_call.1']
    %14 = vsyncpa [#allocation6], 0
    %15 = vsyncpa [#allocation9], 0
    %16 = vsyncpa [#allocation7], 0
    %17 = vsyncpa [#allocation13], 0
    // Predicated region
    $region2: #{tpu_custom_call.1} parent=1 // pred_check
      _
    $region3: #{tpu_custom_call.1} parent=1 // pred_check_branch
      %19 = sbr.rel (0) target = $region5
    $region4: #{tpu_custom_call.1} parent=1 // pred_region
      %s20 = sadd.s32 0, 0
      %s21 = smul.u32 8, %s20
      %p22 = scmp.lt.s32.totalorder %s21, 7
      %s23 = scalar_select %p22, %s21, 7
      %s24 = smul.addr %s23, 8
      %s25 = scalar_lea.vmem %s0, %s24
      %s26 = sadd.s32 0, 0
      %s27 = smul.u32 8, %s26
    $region5: #{tpu_custom_call.1} parent=1 // pred_fallthru
      _
    // Predicated region
    $region6: #{tpu_custom_call.1} parent=1 // pred_check
      _
    $region7: #{tpu_custom_call.1} parent=1 // pred_check_branch
      %29 = sbr.rel (0) target = $region9
    $region8: #{tpu_custom_call.1} parent=1 // pred_region
      %s31 = ssub.s32 128, 128
      %32 = vsyncadd [#allocation6], %s31
      %s34 = sshll.u32 [#allocation5], 4
      %s35 = int_to_ptr.vmem [resolvable:$true] %s34
      %37 = dma.hbm_to_vmem [thread:$0]  %s1, 128, %s35, [#allocation6]
    $region9: #{tpu_custom_call.1} parent=1 // pred_fallthru
      _
    // Predicated region
    $region10: #{tpu_custom_call.1} parent=1 // pred_check
      _
    $region11: #{tpu_custom_call.1} parent=1 // pred_check_branch
      %39 = sbr.rel (0) target = $region13
    $region12: #{tpu_custom_call.1} parent=1 // pred_region
      %s41 = ssub.s32 2048, 2048
      %42 = vsyncadd [#allocation9], %s41
      %s43 = sshll.u32 [#allocation8], 4
      %s44 = int_to_ptr.vmem [resolvable:$true] %s43
      %49 = dma.hbm_to_vmem [thread:$0]  %s2, 2048, %s44, [#allocation9], 128, 128, 8
    $region13: #{tpu_custom_call.1} parent=1 // pred_fallthru
      _
    // Predicated region
    $region14: #{tpu_custom_call.1} parent=1 // pred_check
      _
    $region15: #{tpu_custom_call.1} parent=1 // pred_check_branch
      %51 = sbr.rel (0) target = $region17
    $region16: #{tpu_custom_call.1} parent=1 // pred_region
      _
    $region17: #{tpu_custom_call.1} parent=1 // pred_fallthru
      _
    // Predicated region
    $region18: #{tpu_custom_call.1} parent=1 // pred_check
      _
    $region19: #{tpu_custom_call.1} parent=1 // pred_check_branch
      %53 = sbr.rel (0) target = $region21
    $region20: #{tpu_custom_call.1} parent=1 // pred_region
      _
    $region21: #{tpu_custom_call.1} parent=1 // pred_fallthru
      _
    // Predicated region
    $region22: #{tpu_custom_call.1} parent=1 // pred_check
      _
    $region23: #{tpu_custom_call.1} parent=1 // pred_check_branch
      %55 = sbr.rel (0) target = $region25
    $region24: #{tpu_custom_call.1} parent=1 // pred_region
      %s57 = ssub.s32 2048, 2048
      %58 = vsyncadd [#allocation9], %s57
      %s59 = sshll.u32 [#allocation10], 4
      %s60 = int_to_ptr.vmem [resolvable:$true] %s59
      %65 = dma.hbm_to_vmem [thread:$0]  %s5, 2048, %s60, [#allocation9], 128, 128, 8
    $region25: #{tpu_custom_call.1} parent=1 // pred_fallthru
      _
    // Predicated region
    $region26: #{tpu_custom_call.1} parent=1 // pred_check
      _
    $region27: #{tpu_custom_call.1} parent=1 // pred_check_branch
      %67 = sbr.rel (0) target = $region29
    $region28: #{tpu_custom_call.1} parent=1 // pred_region
      _
    $region29: #{tpu_custom_call.1} parent=1 // pred_fallthru
      _
    // Predicated region
    $region30: #{tpu_custom_call.1} parent=1 // pred_check
      _
    $region31: #{tpu_custom_call.1} parent=1 // pred_check_branch
      %69 = sbr.rel (0) target = $region33
    $region32: #{tpu_custom_call.1} parent=1 // pred_region
      %70 = dma.done [#allocation6], 128
    $region33: #{tpu_custom_call.1} parent=1 // pred_fallthru
      _
    // Predicated region
    $region34: #{tpu_custom_call.1} parent=1 // pred_check
      _
    $region35: #{tpu_custom_call.1} parent=1 // pred_check_branch
      %72 = sbr.rel (0) target = $region37
    $region36: #{tpu_custom_call.1} parent=1 // pred_region
      %73 = dma.done [#allocation9], 2048
    $region37: #{tpu_custom_call.1} parent=1 // pred_fallthru
      _
    // Predicated region
    $region38: #{tpu_custom_call.1} parent=1 // pred_check
      _
    $region39: #{tpu_custom_call.1} parent=1 // pred_check_branch
      %75 = sbr.rel (0) target = $region41
    $region40: #{tpu_custom_call.1} parent=1 // pred_region
      %76 = dma.done [#allocation9], 2048
    $region41: #{tpu_custom_call.1} parent=1 // pred_fallthru
      _
    %s77 = sadd.s32 0, 0
    %s78 = smul.u32 8, %s77
    %p79 = scmp.lt.s32.totalorder %s78, 7
    %s80 = scalar_select %p79, %s78, 7
    %s81 = smul.addr %s80, 8
    %s82 = scalar_lea.vmem %s0, %s81
    %s83 = sadd.s32 0, 0
    %s84 = smul.u32 8, %s83
    %p85 = scmp.lt.s32.totalorder %s84, 7
    %s86 = scalar_select %p85, %s84, 7
    %s87 = smul.addr %s86, 8
    %s88 = scalar_lea.vmem %s0, %s87
    %s89 = sadd.s32 0, 0
    %s90 = smul.u32 8, %s89
    %p92 = scmp.eq.s32.totalorder 0, 0
    // Predicated region
    $region42: #{tpu_custom_call.1} parent=1 // pred_check
      %p93 = pneg %p92
    $region43: #{tpu_custom_call.1} parent=1 // pred_check_branch
      %95 = sbr.rel (%p93) target = $region45
    $region44: #{tpu_custom_call.1} parent=1 // pred_region
      %v96 = vld [vmem:[#allocation5] sm:$0xff]
      %97 = vst [vmem:[#allocation4] sm:$0xff] %v96
    $region45: #{tpu_custom_call.1} parent=1 // pred_fallthru
      _
    %v98 = vld [vmem:[%s88] sm:$0xff]
    %v99 = vld [vmem:[%s88 + $0x8] sm:$0xff]
    %v100 = vld [vmem:[%s88 + $0x10] sm:$0xff]
    %v101 = vld [vmem:[%s88 + $0x18] sm:$0xff]
    %v102 = vld [vmem:[%s88 + $0x20] sm:$0xff]
    %v103 = vld [vmem:[%s88 + $0x28] sm:$0xff]
    %v104 = vld [vmem:[%s88 + $0x30] sm:$0xff]
    %v105 = vld [vmem:[%s88 + $0x38] sm:$0xff]
    %v106 = vlaneseq
    %v107 = vand.u32 %v106, 127
    %108 = vset.pattern.permute.xlu0 0
    %109 = vperm.xlu0 %108, %v98
    %v110 = vpop.permute.xlu0 %109
    %111 = vset.pattern.permute.xlu0 0
    %112 = vperm.xlu0 %111, %v99
    %v113 = vpop.permute.xlu0 %112
    %114 = vset.pattern.permute.xlu0 0
    %115 = vperm.xlu0 %114, %v100
    %v116 = vpop.permute.xlu0 %115
    %117 = vset.pattern.permute.xlu0 0
    %118 = vperm.xlu0 %117, %v101
    %v119 = vpop.permute.xlu0 %118
    %120 = vset.pattern.permute.xlu0 0
    %121 = vperm.xlu0 %120, %v102
    %v122 = vpop.permute.xlu0 %121
    %123 = vset.pattern.permute.xlu0 0
    %124 = vperm.xlu0 %123, %v103
    %v125 = vpop.permute.xlu0 %124
    %126 = vset.pattern.permute.xlu0 0
    %127 = vperm.xlu0 %126, %v104
    %v128 = vpop.permute.xlu0 %127
    %129 = vset.pattern.permute.xlu0 0
    %130 = vperm.xlu0 %129, %v105
    %v131 = vpop.permute.xlu0 %130
    %vm132 = vcmp.eq.s32.totalorder %v110, %v107
    %vm133 = vcmp.eq.s32.totalorder %v113, %v107
    %vm134 = vcmp.eq.s32.totalorder %v116, %v107
    %vm135 = vcmp.eq.s32.totalorder %v119, %v107
    %vm136 = vcmp.eq.s32.totalorder %v122, %v107
    %vm137 = vcmp.eq.s32.totalorder %v125, %v107
    %vm138 = vcmp.eq.s32.totalorder %v128, %v107
    %vm139 = vcmp.eq.s32.totalorder %v131, %v107
    %v140 = vsel %vm132, 1, 0
    %v141 = vsel %vm133, 1, 0
    %v142 = vsel %vm134, 1, 0
    %v143 = vsel %vm135, 1, 0
    %v144 = vsel %vm136, 1, 0
    %v145 = vsel %vm137, 1, 0
    %v146 = vsel %vm138, 1, 0
    %v147 = vsel %vm139, 1, 0
    %v148 = vcvt.s32.f32 %v140
    %v149 = vcvt.s32.f32 %v141
    %v150 = vcvt.s32.f32 %v142
    %v151 = vcvt.s32.f32 %v143
    %v152 = vcvt.s32.f32 %v144
    %v153 = vcvt.s32.f32 %v145
    %v154 = vcvt.s32.f32 %v146
    %v155 = vcvt.s32.f32 %v147
    %v156 = vld [vmem:[#allocation8] sm:$0xff]
    %v157 = vld [vmem:[#allocation8 + $0x8] sm:$0xff]
    %v158 = vld [vmem:[#allocation8 + $0x10] sm:$0xff]
    %v159 = vld [vmem:[#allocation8 + $0x18] sm:$0xff]
    %v160 = vld [vmem:[#allocation8 + $0x20] sm:$0xff]
    %v161 = vld [vmem:[#allocation8 + $0x28] sm:$0xff]
    %v162 = vld [vmem:[#allocation8 + $0x30] sm:$0xff]
    %v163 = vld [vmem:[#allocation8 + $0x38] sm:$0xff]
    %v164 = vld [vmem:[#allocation8 + $0x40] sm:$0xff]
    %v165 = vld [vmem:[#allocation8 + $0x48] sm:$0xff]
    %v166 = vld [vmem:[#allocation8 + $0x50] sm:$0xff]
    %v167 = vld [vmem:[#allocation8 + $0x58] sm:$0xff]
    %v168 = vld [vmem:[#allocation8 + $0x60] sm:$0xff]
    %v169 = vld [vmem:[#allocation8 + $0x68] sm:$0xff]
    %v170 = vld [vmem:[#allocation8 + $0x70] sm:$0xff]
    %v171 = vld [vmem:[#allocation8 + $0x78] sm:$0xff]
    %v172 = vld [vmem:[%s4] sm:$0x1]
    %v174 = vlaneseq
    %v175 = vshrl.u32 %v174, 7
    %v176 = vsub.s32 0, %v175
    %v177 = vrot.slane %v172, %v176
    %179 = vmatprep.subr.mxu0 0.0
    %180 = vmatpush1.msra.mxu0 %v171
    %181 = vmatprep.subr.mxu0 0.0
    %182 = vmatpush1.msra.mxu0 %v170
    %183 = vmatprep.subr.mxu0 0.0
    %184 = vmatpush1.msra.mxu0 %v169
    %185 = vmatprep.subr.mxu0 0.0
    %186 = vmatpush1.msra.mxu0 %v168
    %187 = vmatprep.subr.mxu0 0.0
    %188 = vmatpush1.msra.mxu0 %v167
    %189 = vmatprep.subr.mxu0 0.0
    %190 = vmatpush1.msra.mxu0 %v166
    %191 = vmatprep.subr.mxu0 0.0
    %192 = vmatpush1.msra.mxu0 %v165
    %193 = vmatprep.subr.mxu0 0.0
    %194 = vmatpush1.msra.mxu0 %v164
    %195 = vmatprep.subr.mxu0 0.0
    %196 = vmatpush1.msra.mxu0 %v163
    %197 = vmatprep.subr.mxu0 0.0
    %198 = vmatpush1.msra.mxu0 %v162
    %199 = vmatprep.subr.mxu0 0.0
    %200 = vmatpush1.msra.mxu0 %v161
    %201 = vmatprep.subr.mxu0 0.0
    %202 = vmatpush1.msra.mxu0 %v160
    %203 = vmatprep.subr.mxu0 0.0
    %204 = vmatpush1.msra.mxu0 %v159
    %205 = vmatprep.subr.mxu0 0.0
    %206 = vmatpush1.msra.mxu0 %v158
    %207 = vmatprep.subr.mxu0 0.0
    %208 = vmatpush1.msra.mxu0 %v157
    %209 = vmatprep.subr.mxu0 0.0
    %210 = vmatpush1.msra.mxu0 %v156
    %211 = vmatprep.subr.mxu0 0.0
    %212 = vmatpush2.msra.mxu0 0.0
    %213 = vmatprep.subr.mxu0 0.0
    %214 = vmatpush2.msra.mxu0 0.0
    %215 = vmatprep.subr.mxu0 0.0
    %216 = vmatpush2.msra.mxu0 0.0
    %217 = vmatprep.subr.mxu0 0.0
    %218 = vmatpush2.msra.mxu0 0.0
    %219 = vmatprep.subr.mxu0 0.0
    %220 = vmatpush2.msra.mxu0 0.0
    %221 = vmatprep.subr.mxu0 0.0
    %222 = vmatpush2.msra.mxu0 0.0
    %223 = vmatprep.subr.mxu0 0.0
    %224 = vmatpush2.msra.mxu0 0.0
    %225 = vmatprep.subr.mxu0 0.0
    %226 = vmatpush2.msra.mxu0 0.0
    %227 = vmatprep.subr.mxu0 0.0
    %228 = vmatpush2.msra.mxu0 0.0
    %229 = vmatprep.subr.mxu0 0.0
    %230 = vmatpush2.msra.mxu0 0.0
    %231 = vmatprep.subr.mxu0 0.0
    %232 = vmatpush2.msra.mxu0 0.0
    %233 = vmatprep.subr.mxu0 0.0
    %234 = vmatpush2.msra.mxu0 0.0
    %235 = vmatprep.subr.mxu0 0.0
    %236 = vmatpush2.msra.mxu0 0.0
    %237 = vmatprep.subr.mxu0 0.0
    %238 = vmatpush2.msra.mxu0 0.0
    %239 = vmatprep.subr.mxu0 0.0
    %240 = vmatpush2.msra.mxu0 0.0
    %241 = vmatprep.subr.mxu0 0.0
    %242 = vmatpush2.msra.mxu0 0.0
    %243 = vmatprep.mubr.f32.mxu0 0.0
    %244 = vmatmul.mubr.f32.gmra.mxu0 %v148
    %v245 = vpop.f32.mrf.mxu0
    %v246 = vadd.f32 %v177, %v245
    %v247 = vpop.f32.mrf.mxu0
    %248 = vmatprep.mubr.f32.mxu0 0.0
    %249 = vmatmul.mubr.f32.gmra.mxu0 %v149
    %v250 = vpop.f32.mrf.mxu0
    %v251 = vadd.f32 %v177, %v250
    %v252 = vpop.f32.mrf.mxu0
    %253 = vmatprep.mubr.f32.mxu0 0.0
    %254 = vmatmul.mubr.f32.gmra.mxu0 %v150
    %v255 = vpop.f32.mrf.mxu0
    %v256 = vadd.f32 %v177, %v255
    %v257 = vpop.f32.mrf.mxu0
    %258 = vmatprep.mubr.f32.mxu0 0.0
    %259 = vmatmul.mubr.f32.gmra.mxu0 %v151
    %v260 = vpop.f32.mrf.mxu0
    %v261 = vadd.f32 %v177, %v260
    %v262 = vpop.f32.mrf.mxu0
    %263 = vmatprep.mubr.f32.mxu0 0.0
    %264 = vmatmul.mubr.f32.gmra.mxu0 %v152
    %v265 = vpop.f32.mrf.mxu0
    %v266 = vadd.f32 %v177, %v265
    %v267 = vpop.f32.mrf.mxu0
    %268 = vmatprep.mubr.f32.mxu0 0.0
    %269 = vmatmul.mubr.f32.gmra.mxu0 %v153
    %v270 = vpop.f32.mrf.mxu0
    %v271 = vadd.f32 %v177, %v270
    %v272 = vpop.f32.mrf.mxu0
    %273 = vmatprep.mubr.f32.mxu0 0.0
    %274 = vmatmul.mubr.f32.gmra.mxu0 %v154
    %v275 = vpop.f32.mrf.mxu0
    %v276 = vadd.f32 %v177, %v275
    %v277 = vpop.f32.mrf.mxu0
    %278 = vmatprep.mubr.f32.mxu0 0.0
    %279 = vmatmul.mubr.f32.gmra.mxu0 %v155
    %v280 = vpop.f32.mrf.mxu0
    %v281 = vadd.f32 %v177, %v280
    %v282 = vpop.f32.mrf.mxu0
    %283 = vdwg.mxu0
    %284 = vst [vmem:[#allocation2] sm:$0xff] %v246
    %285 = vst [vmem:[#allocation2 + $0x8] sm:$0xff] %v251
    %286 = vst [vmem:[#allocation2 + $0x10] sm:$0xff] %v256
    %287 = vst [vmem:[#allocation2 + $0x18] sm:$0xff] %v261
    %288 = vst [vmem:[#allocation2 + $0x20] sm:$0xff] %v266
    %289 = vst [vmem:[#allocation2 + $0x28] sm:$0xff] %v271
    %290 = vst [vmem:[#allocation2 + $0x30] sm:$0xff] %v276
    %291 = vst [vmem:[#allocation2 + $0x38] sm:$0xff] %v281
    %v292 = vld [vmem:[%s3] sm:$0xf]
    %v293 = vld [vmem:[%s3 + $0x4] sm:$0xf]
    %v294 = vld [vmem:[%s3 + $0x8] sm:$0xf]
    %v295 = vld [vmem:[%s3 + $0xc] sm:$0xf]
    %v296 = vld [vmem:[%s3 + $0x10] sm:$0xf]
    %v297 = vld [vmem:[%s3 + $0x14] sm:$0xf]
    %v298 = vld [vmem:[%s3 + $0x18] sm:$0xf]
    %v299 = vld [vmem:[%s3 + $0x1c] sm:$0xf]
    %v300 = vld [vmem:[%s3 + $0x20] sm:$0xf]
    %v301 = vld [vmem:[%s3 + $0x24] sm:$0xf]
    %v302 = vld [vmem:[%s3 + $0x28] sm:$0xf]
    %v303 = vld [vmem:[%s3 + $0x2c] sm:$0xf]
    %v304 = vld [vmem:[%s3 + $0x30] sm:$0xf]
    %v305 = vld [vmem:[%s3 + $0x34] sm:$0xf]
    %v306 = vld [vmem:[%s3 + $0x38] sm:$0xf]
    %v307 = vld [vmem:[%s3 + $0x3c] sm:$0xf]
    %v308 = vld [vmem:[#allocation4] sm:$0xff]
    %v309 = vld [vmem:[#allocation2] sm:$0xff]
    %v310 = vpack.c.bf16 %v308, %v308
    %v327 = vunpack.c.l.b16 %v292
    %v328 = vunpack.c.l.b16 %v293
    %v329 = vunpack.c.l.b16 %v294
    %v330 = vunpack.c.l.b16 %v295
    %v331 = vunpack.c.l.b16 %v296
    %v332 = vunpack.c.l.b16 %v297
    %v333 = vunpack.c.l.b16 %v298
    %v334 = vunpack.c.l.b16 %v299
    %v335 = vunpack.c.l.b16 %v300
    %v336 = vunpack.c.l.b16 %v301
    %v337 = vunpack.c.l.b16 %v302
    %v338 = vunpack.c.l.b16 %v303
    %v339 = vunpack.c.l.b16 %v304
    %v340 = vunpack.c.l.b16 %v305
    %v341 = vunpack.c.l.b16 %v306
    %v342 = vunpack.c.l.b16 %v307
    %v343 = vpack.c.b16 %v328, %v327
    %v344 = vpack.c.b16 %v330, %v329
    %v345 = vpack.c.b16 %v332, %v331
    %v346 = vpack.c.b16 %v334, %v333
    %v347 = vpack.c.b16 %v336, %v335
    %v348 = vpack.c.b16 %v338, %v337
    %v349 = vpack.c.b16 %v340, %v339
    %v350 = vpack.c.b16 %v342, %v341
    %359 = vmatprep.subr.bf16.mxu0 0
    %360 = vmatpush1.bf16.msra.mxu0 %v350
    %361 = vmatprep.subr.bf16.mxu0 0
    %362 = vmatpush1.bf16.msra.mxu0 %v349
    %363 = vmatprep.subr.bf16.mxu0 0
    %364 = vmatpush1.bf16.msra.mxu0 %v348
    %365 = vmatprep.subr.bf16.mxu0 0
    %366 = vmatpush1.bf16.msra.mxu0 %v347
    %367 = vmatprep.subr.bf16.mxu0 0
    %368 = vmatpush1.bf16.msra.mxu0 %v346
    %369 = vmatprep.subr.bf16.mxu0 0
    %370 = vmatpush1.bf16.msra.mxu0 %v345
    %371 = vmatprep.subr.bf16.mxu0 0
    %372 = vmatpush1.bf16.msra.mxu0 %v344
    %373 = vmatprep.subr.bf16.mxu0 0
    %374 = vmatpush1.bf16.msra.mxu0 %v343
    %375 = vmatprep.subr.bf16.mxu0 0
    %376 = vmatpush2.bf16.msra.mxu0 0
    %377 = vmatprep.subr.bf16.mxu0 0
    %378 = vmatpush2.bf16.msra.mxu0 0
    %379 = vmatprep.subr.bf16.mxu0 0
    %380 = vmatpush2.bf16.msra.mxu0 0
    %381 = vmatprep.subr.bf16.mxu0 0
    %382 = vmatpush2.bf16.msra.mxu0 0
    %383 = vmatprep.subr.bf16.mxu0 0
    %384 = vmatpush2.bf16.msra.mxu0 0
    %385 = vmatprep.subr.bf16.mxu0 0
    %386 = vmatpush2.bf16.msra.mxu0 0
    %387 = vmatprep.subr.bf16.mxu0 0
    %388 = vmatpush2.bf16.msra.mxu0 0
    %389 = vmatprep.subr.bf16.mxu0 0
    %390 = vmatpush2.bf16.msra.mxu0 0
    %391 = vmatprep.mubr.bf16.mxu0 0
    %392 = vmatmul.mubr.bf16.gmra.mxu0 %v310
    %v393 = vpop.f32.mrf.mxu0
    %v394 = vadd.f32 0.0, %v393
    %v395 = vpop.f32.mrf.mxu0
    %v396 = vpop.f32.mrf.mxu0
    %v397 = vpop.f32.mrf.mxu0
    %398 = vdwg.mxu0
    %v399 = vadd.f32 %v309, %v394
    %v400 = vtanh.pop %v399
    %401 = vst [vmem:[#allocation3] sm:$0xff] %v400
    %s402 = scalar_lea.vmem [#allocation2], 8
    %v403 = vld [vmem:[%s402] sm:$0xff]
    %v404 = vpack.c.bf16 %v400, %v400
    %405 = vmatprep.subr.bf16.mxu0 0
    %406 = vmatpush1.bf16.msra.mxu0 %v350
    %407 = vmatprep.subr.bf16.mxu0 0
    %408 = vmatpush1.bf16.msra.mxu0 %v349
    %409 = vmatprep.subr.bf16.mxu0 0
    %410 = vmatpush1.bf16.msra.mxu0 %v348
    %411 = vmatprep.subr.bf16.mxu0 0
    %412 = vmatpush1.bf16.msra.mxu0 %v347
    %413 = vmatprep.subr.bf16.mxu0 0
    %414 = vmatpush1.bf16.msra.mxu0 %v346
    %415 = vmatprep.subr.bf16.mxu0 0
    %416 = vmatpush1.bf16.msra.mxu0 %v345
    %417 = vmatprep.subr.bf16.mxu0 0
    %418 = vmatpush1.bf16.msra.mxu0 %v344
    %419 = vmatprep.subr.bf16.mxu0 0
    %420 = vmatpush1.bf16.msra.mxu0 %v343
    %421 = vmatprep.subr.bf16.mxu0 0
    %422 = vmatpush2.bf16.msra.mxu0 0
    %423 = vmatprep.subr.bf16.mxu0 0
    %424 = vmatpush2.bf16.msra.mxu0 0
    %425 = vmatprep.subr.bf16.mxu0 0
    %426 = vmatpush2.bf16.msra.mxu0 0
    %427 = vmatprep.subr.bf16.mxu0 0
    %428 = vmatpush2.bf16.msra.mxu0 0
    %429 = vmatprep.subr.bf16.mxu0 0
    %430 = vmatpush2.bf16.msra.mxu0 0
    %431 = vmatprep.subr.bf16.mxu0 0
    %432 = vmatpush2.bf16.msra.mxu0 0
    %433 = vmatprep.subr.bf16.mxu0 0
    %434 = vmatpush2.bf16.msra.mxu0 0
    %435 = vmatprep.subr.bf16.mxu0 0
    %436 = vmatpush2.bf16.msra.mxu0 0
    %437 = vmatprep.mubr.bf16.mxu0 0
    %438 = vmatmul.mubr.bf16.gmra.mxu0 %v404
    %v439 = vpop.f32.mrf.mxu0
    %v440 = vadd.f32 0.0, %v439
    %v441 = vpop.f32.mrf.mxu0
    %v442 = vpop.f32.mrf.mxu0
    %v443 = vpop.f32.mrf.mxu0
    %444 = vdwg.mxu0
    %v445 = vadd.f32 %v403, %v440
    %v446 = vtanh.pop %v445
    %s447 = scalar_lea.vmem [#allocation3], 8
    %448 = vst [vmem:[%s447] sm:$0xff] %v446
    %s449 = scalar_lea.vmem [#allocation2], 16
    %v450 = vld [vmem:[%s449] sm:$0xff]
    %v451 = vpack.c.bf16 %v446, %v446
    %452 = vmatprep.subr.bf16.mxu0 0
    %453 = vmatpush1.bf16.msra.mxu0 %v350
    %454 = vmatprep.subr.bf16.mxu0 0
    %455 = vmatpush1.bf16.msra.mxu0 %v349
    %456 = vmatprep.subr.bf16.mxu0 0
    %457 = vmatpush1.bf16.msra.mxu0 %v348
    %458 = vmatprep.subr.bf16.mxu0 0
    %459 = vmatpush1.bf16.msra.mxu0 %v347
    %460 = vmatprep.subr.bf16.mxu0 0
    %461 = vmatpush1.bf16.msra.mxu0 %v346
    %462 = vmatprep.subr.bf16.mxu0 0
    %463 = vmatpush1.bf16.msra.mxu0 %v345
    %464 = vmatprep.subr.bf16.mxu0 0
    %465 = vmatpush1.bf16.msra.mxu0 %v344
    %466 = vmatprep.subr.bf16.mxu0 0
    %467 = vmatpush1.bf16.msra.mxu0 %v343
    %468 = vmatprep.subr.bf16.mxu0 0
    %469 = vmatpush2.bf16.msra.mxu0 0
    %470 = vmatprep.subr.bf16.mxu0 0
    %471 = vmatpush2.bf16.msra.mxu0 0
    %472 = vmatprep.subr.bf16.mxu0 0
    %473 = vmatpush2.bf16.msra.mxu0 0
    %474 = vmatprep.subr.bf16.mxu0 0
    %475 = vmatpush2.bf16.msra.mxu0 0
    %476 = vmatprep.subr.bf16.mxu0 0
    %477 = vmatpush2.bf16.msra.mxu0 0
    %478 = vmatprep.subr.bf16.mxu0 0
    %479 = vmatpush2.bf16.msra.mxu0 0
    %480 = vmatprep.subr.bf16.mxu0 0
    %481 = vmatpush2.bf16.msra.mxu0 0
    %482 = vmatprep.subr.bf16.mxu0 0
    %483 = vmatpush2.bf16.msra.mxu0 0
    %484 = vmatprep.mubr.bf16.mxu0 0
    %485 = vmatmul.mubr.bf16.gmra.mxu0 %v451
    %v486 = vpop.f32.mrf.mxu0
    %v487 = vadd.f32 0.0, %v486
    %v488 = vpop.f32.mrf.mxu0
    %v489 = vpop.f32.mrf.mxu0
    %v490 = vpop.f32.mrf.mxu0
    %491 = vdwg.mxu0
    %v492 = vadd.f32 %v450, %v487
    %v493 = vtanh.pop %v492
    %s494 = scalar_lea.vmem [#allocation3], 16
    %495 = vst [vmem:[%s494] sm:$0xff] %v493
    %s496 = scalar_lea.vmem [#allocation2], 24
    %v497 = vld [vmem:[%s496] sm:$0xff]
    %v498 = vpack.c.bf16 %v493, %v493
    %499 = vmatprep.subr.bf16.mxu0 0
    %500 = vmatpush1.bf16.msra.mxu0 %v350
    %501 = vmatprep.subr.bf16.mxu0 0
    %502 = vmatpush1.bf16.msra.mxu0 %v349
    %503 = vmatprep.subr.bf16.mxu0 0
    %504 = vmatpush1.bf16.msra.mxu0 %v348
    %505 = vmatprep.subr.bf16.mxu0 0
    %506 = vmatpush1.bf16.msra.mxu0 %v347
    %507 = vmatprep.subr.bf16.mxu0 0
    %508 = vmatpush1.bf16.msra.mxu0 %v346
    %509 = vmatprep.subr.bf16.mxu0 0
    %510 = vmatpush1.bf16.msra.mxu0 %v345
    %511 = vmatprep.subr.bf16.mxu0 0
    %512 = vmatpush1.bf16.msra.mxu0 %v344
    %513 = vmatprep.subr.bf16.mxu0 0
    %514 = vmatpush1.bf16.msra.mxu0 %v343
    %515 = vmatprep.subr.bf16.mxu0 0
    %516 = vmatpush2.bf16.msra.mxu0 0
    %517 = vmatprep.subr.bf16.mxu0 0
    %518 = vmatpush2.bf16.msra.mxu0 0
    %519 = vmatprep.subr.bf16.mxu0 0
    %520 = vmatpush2.bf16.msra.mxu0 0
    %521 = vmatprep.subr.bf16.mxu0 0
    %522 = vmatpush2.bf16.msra.mxu0 0
    %523 = vmatprep.subr.bf16.mxu0 0
    %524 = vmatpush2.bf16.msra.mxu0 0
    %525 = vmatprep.subr.bf16.mxu0 0
    %526 = vmatpush2.bf16.msra.mxu0 0
    %527 = vmatprep.subr.bf16.mxu0 0
    %528 = vmatpush2.bf16.msra.mxu0 0
    %529 = vmatprep.subr.bf16.mxu0 0
    %530 = vmatpush2.bf16.msra.mxu0 0
    %531 = vmatprep.mubr.bf16.mxu0 0
    %532 = vmatmul.mubr.bf16.gmra.mxu0 %v498
    %v533 = vpop.f32.mrf.mxu0
    %v534 = vadd.f32 0.0, %v533
    %v535 = vpop.f32.mrf.mxu0
    %v536 = vpop.f32.mrf.mxu0
    %v537 = vpop.f32.mrf.mxu0
    %538 = vdwg.mxu0
    %v539 = vadd.f32 %v497, %v534
    %v540 = vtanh.pop %v539
    %s541 = scalar_lea.vmem [#allocation3], 24
    %542 = vst [vmem:[%s541] sm:$0xff] %v540
    %s543 = scalar_lea.vmem [#allocation2], 32
    %v544 = vld [vmem:[%s543] sm:$0xff]
    %v545 = vpack.c.bf16 %v540, %v540
    %546 = vmatprep.subr.bf16.mxu0 0
    %547 = vmatpush1.bf16.msra.mxu0 %v350
    %548 = vmatprep.subr.bf16.mxu0 0
    %549 = vmatpush1.bf16.msra.mxu0 %v349
    %550 = vmatprep.subr.bf16.mxu0 0
    %551 = vmatpush1.bf16.msra.mxu0 %v348
    %552 = vmatprep.subr.bf16.mxu0 0
    %553 = vmatpush1.bf16.msra.mxu0 %v347
    %554 = vmatprep.subr.bf16.mxu0 0
    %555 = vmatpush1.bf16.msra.mxu0 %v346
    %556 = vmatprep.subr.bf16.mxu0 0
    %557 = vmatpush1.bf16.msra.mxu0 %v345
    %558 = vmatprep.subr.bf16.mxu0 0
    %559 = vmatpush1.bf16.msra.mxu0 %v344
    %560 = vmatprep.subr.bf16.mxu0 0
    %561 = vmatpush1.bf16.msra.mxu0 %v343
    %562 = vmatprep.subr.bf16.mxu0 0
    %563 = vmatpush2.bf16.msra.mxu0 0
    %564 = vmatprep.subr.bf16.mxu0 0
    %565 = vmatpush2.bf16.msra.mxu0 0
    %566 = vmatprep.subr.bf16.mxu0 0
    %567 = vmatpush2.bf16.msra.mxu0 0
    %568 = vmatprep.subr.bf16.mxu0 0
    %569 = vmatpush2.bf16.msra.mxu0 0
    %570 = vmatprep.subr.bf16.mxu0 0
    %571 = vmatpush2.bf16.msra.mxu0 0
    %572 = vmatprep.subr.bf16.mxu0 0
    %573 = vmatpush2.bf16.msra.mxu0 0
    %574 = vmatprep.subr.bf16.mxu0 0
    %575 = vmatpush2.bf16.msra.mxu0 0
    %576 = vmatprep.subr.bf16.mxu0 0
    %577 = vmatpush2.bf16.msra.mxu0 0
    %578 = vmatprep.mubr.bf16.mxu0 0
    %579 = vmatmul.mubr.bf16.gmra.mxu0 %v545
    %v580 = vpop.f32.mrf.mxu0
    %v581 = vadd.f32 0.0, %v580
    %v582 = vpop.f32.mrf.mxu0
    %v583 = vpop.f32.mrf.mxu0
    %v584 = vpop.f32.mrf.mxu0
    %585 = vdwg.mxu0
    %v586 = vadd.f32 %v544, %v581
    %v587 = vtanh.pop %v586
    %s588 = scalar_lea.vmem [#allocation3], 32
    %589 = vst [vmem:[%s588] sm:$0xff] %v587
    %s590 = scalar_lea.vmem [#allocation2], 40
    %v591 = vld [vmem:[%s590] sm:$0xff]
    %v592 = vpack.c.bf16 %v587, %v587
    %593 = vmatprep.subr.bf16.mxu0 0
    %594 = vmatpush1.bf16.msra.mxu0 %v350
    %595 = vmatprep.subr.bf16.mxu0 0
    %596 = vmatpush1.bf16.msra.mxu0 %v349
    %597 = vmatprep.subr.bf16.mxu0 0
    %598 = vmatpush1.bf16.msra.mxu0 %v348
    %599 = vmatprep.subr.bf16.mxu0 0
    %600 = vmatpush1.bf16.msra.mxu0 %v347
    %601 = vmatprep.subr.bf16.mxu0 0
    %602 = vmatpush1.bf16.msra.mxu0 %v346
    %603 = vmatprep.subr.bf16.mxu0 0
    %604 = vmatpush1.bf16.msra.mxu0 %v345
    %605 = vmatprep.subr.bf16.mxu0 0
    %606 = vmatpush1.bf16.msra.mxu0 %v344
    %607 = vmatprep.subr.bf16.mxu0 0
    %608 = vmatpush1.bf16.msra.mxu0 %v343
    %609 = vmatprep.subr.bf16.mxu0 0
    %610 = vmatpush2.bf16.msra.mxu0 0
    %611 = vmatprep.subr.bf16.mxu0 0
    %612 = vmatpush2.bf16.msra.mxu0 0
    %613 = vmatprep.subr.bf16.mxu0 0
    %614 = vmatpush2.bf16.msra.mxu0 0
    %615 = vmatprep.subr.bf16.mxu0 0
    %616 = vmatpush2.bf16.msra.mxu0 0
    %617 = vmatprep.subr.bf16.mxu0 0
    %618 = vmatpush2.bf16.msra.mxu0 0
    %619 = vmatprep.subr.bf16.mxu0 0
    %620 = vmatpush2.bf16.msra.mxu0 0
    %621 = vmatprep.subr.bf16.mxu0 0
    %622 = vmatpush2.bf16.msra.mxu0 0
    %623 = vmatprep.subr.bf16.mxu0 0
    %624 = vmatpush2.bf16.msra.mxu0 0
    %625 = vmatprep.mubr.bf16.mxu0 0
    %626 = vmatmul.mubr.bf16.gmra.mxu0 %v592
    %v627 = vpop.f32.mrf.mxu0
    %v628 = vadd.f32 0.0, %v627
    %v629 = vpop.f32.mrf.mxu0
    %v630 = vpop.f32.mrf.mxu0
    %v631 = vpop.f32.mrf.mxu0
    %632 = vdwg.mxu0
    %v633 = vadd.f32 %v591, %v628
    %v634 = vtanh.pop %v633
    %s635 = scalar_lea.vmem [#allocation3], 40
    %636 = vst [vmem:[%s635] sm:$0xff] %v634
    %s637 = scalar_lea.vmem [#allocation2], 48
    %v638 = vld [vmem:[%s637] sm:$0xff]
    %v639 = vpack.c.bf16 %v634, %v634
    %640 = vmatprep.subr.bf16.mxu0 0
    %641 = vmatpush1.bf16.msra.mxu0 %v350
    %642 = vmatprep.subr.bf16.mxu0 0
    %643 = vmatpush1.bf16.msra.mxu0 %v349
    %644 = vmatprep.subr.bf16.mxu0 0
    %645 = vmatpush1.bf16.msra.mxu0 %v348
    %646 = vmatprep.subr.bf16.mxu0 0
    %647 = vmatpush1.bf16.msra.mxu0 %v347
    %648 = vmatprep.subr.bf16.mxu0 0
    %649 = vmatpush1.bf16.msra.mxu0 %v346
    %650 = vmatprep.subr.bf16.mxu0 0
    %651 = vmatpush1.bf16.msra.mxu0 %v345
    %652 = vmatprep.subr.bf16.mxu0 0
    %653 = vmatpush1.bf16.msra.mxu0 %v344
    %654 = vmatprep.subr.bf16.mxu0 0
    %655 = vmatpush1.bf16.msra.mxu0 %v343
    %656 = vmatprep.subr.bf16.mxu0 0
    %657 = vmatpush2.bf16.msra.mxu0 0
    %658 = vmatprep.subr.bf16.mxu0 0
    %659 = vmatpush2.bf16.msra.mxu0 0
    %660 = vmatprep.subr.bf16.mxu0 0
    %661 = vmatpush2.bf16.msra.mxu0 0
    %662 = vmatprep.subr.bf16.mxu0 0
    %663 = vmatpush2.bf16.msra.mxu0 0
    %664 = vmatprep.subr.bf16.mxu0 0
    %665 = vmatpush2.bf16.msra.mxu0 0
    %666 = vmatprep.subr.bf16.mxu0 0
    %667 = vmatpush2.bf16.msra.mxu0 0
    %668 = vmatprep.subr.bf16.mxu0 0
    %669 = vmatpush2.bf16.msra.mxu0 0
    %670 = vmatprep.subr.bf16.mxu0 0
    %671 = vmatpush2.bf16.msra.mxu0 0
    %672 = vmatprep.mubr.bf16.mxu0 0
    %673 = vmatmul.mubr.bf16.gmra.mxu0 %v639
    %v674 = vpop.f32.mrf.mxu0
    %v675 = vadd.f32 0.0, %v674
    %v676 = vpop.f32.mrf.mxu0
    %v677 = vpop.f32.mrf.mxu0
    %v678 = vpop.f32.mrf.mxu0
    %679 = vdwg.mxu0
    %v680 = vadd.f32 %v638, %v675
    %v681 = vtanh.pop %v680
    %s682 = scalar_lea.vmem [#allocation3], 48
    %683 = vst [vmem:[%s682] sm:$0xff] %v681
    %s684 = scalar_lea.vmem [#allocation2], 56
    %v685 = vld [vmem:[%s684] sm:$0xff]
    %v686 = vpack.c.bf16 %v681, %v681
    %687 = vmatprep.subr.bf16.mxu0 0
    %688 = vmatpush1.bf16.msra.mxu0 %v350
    %689 = vmatprep.subr.bf16.mxu0 0
    %690 = vmatpush1.bf16.msra.mxu0 %v349
    %691 = vmatprep.subr.bf16.mxu0 0
    %692 = vmatpush1.bf16.msra.mxu0 %v348
    %693 = vmatprep.subr.bf16.mxu0 0
    %694 = vmatpush1.bf16.msra.mxu0 %v347
    %695 = vmatprep.subr.bf16.mxu0 0
    %696 = vmatpush1.bf16.msra.mxu0 %v346
    %697 = vmatprep.subr.bf16.mxu0 0
    %698 = vmatpush1.bf16.msra.mxu0 %v345
    %699 = vmatprep.subr.bf16.mxu0 0
    %700 = vmatpush1.bf16.msra.mxu0 %v344
    %701 = vmatprep.subr.bf16.mxu0 0
    %702 = vmatpush1.bf16.msra.mxu0 %v343
    %703 = vmatprep.subr.bf16.mxu0 0
    %704 = vmatpush2.bf16.msra.mxu0 0
    %705 = vmatprep.subr.bf16.mxu0 0
    %706 = vmatpush2.bf16.msra.mxu0 0
    %707 = vmatprep.subr.bf16.mxu0 0
    %708 = vmatpush2.bf16.msra.mxu0 0
    %709 = vmatprep.subr.bf16.mxu0 0
    %710 = vmatpush2.bf16.msra.mxu0 0
    %711 = vmatprep.subr.bf16.mxu0 0
    %712 = vmatpush2.bf16.msra.mxu0 0
    %713 = vmatprep.subr.bf16.mxu0 0
    %714 = vmatpush2.bf16.msra.mxu0 0
    %715 = vmatprep.subr.bf16.mxu0 0
    %716 = vmatpush2.bf16.msra.mxu0 0
    %717 = vmatprep.subr.bf16.mxu0 0
    %718 = vmatpush2.bf16.msra.mxu0 0
    %719 = vmatprep.mubr.bf16.mxu0 0
    %720 = vmatmul.mubr.bf16.gmra.mxu0 %v686
    %v721 = vpop.f32.mrf.mxu0
    %v722 = vadd.f32 0.0, %v721
    %v723 = vpop.f32.mrf.mxu0
    %v724 = vpop.f32.mrf.mxu0
    %v725 = vpop.f32.mrf.mxu0
    %726 = vdwg.mxu0
    %v727 = vadd.f32 %v685, %v722
    %v728 = vtanh.pop %v727
    %s729 = scalar_lea.vmem [#allocation3], 56
    %730 = vst [vmem:[%s729] sm:$0xff] %v728
    %731 = vst [vmem:[#allocation4] sm:$0xff] %v728
    %v732 = vld [vmem:[#allocation3] sm:$0xff]
    %v733 = vld [vmem:[#allocation3 + $0x8] sm:$0xff]
    %v734 = vld [vmem:[#allocation3 + $0x10] sm:$0xff]
    %v735 = vld [vmem:[#allocation3 + $0x18] sm:$0xff]
    %v736 = vld [vmem:[#allocation3 + $0x20] sm:$0xff]
    %v737 = vld [vmem:[#allocation3 + $0x28] sm:$0xff]
    %v738 = vld [vmem:[#allocation3 + $0x30] sm:$0xff]
    %v739 = vld [vmem:[#allocation3 + $0x38] sm:$0xff]
    %v740 = vld [vmem:[#allocation10] sm:$0xff]
    %v741 = vld [vmem:[#allocation10 + $0x8] sm:$0xff]
    %v742 = vld [vmem:[#allocation10 + $0x10] sm:$0xff]
    %v743 = vld [vmem:[#allocation10 + $0x18] sm:$0xff]
    %v744 = vld [vmem:[#allocation10 + $0x20] sm:$0xff]
    %v745 = vld [vmem:[#allocation10 + $0x28] sm:$0xff]
    %v746 = vld [vmem:[#allocation10 + $0x30] sm:$0xff]
    %v747 = vld [vmem:[#allocation10 + $0x38] sm:$0xff]
    %v748 = vld [vmem:[#allocation10 + $0x40] sm:$0xff]
    %v749 = vld [vmem:[#allocation10 + $0x48] sm:$0xff]
    %v750 = vld [vmem:[#allocation10 + $0x50] sm:$0xff]
    %v751 = vld [vmem:[#allocation10 + $0x58] sm:$0xff]
    %v752 = vld [vmem:[#allocation10 + $0x60] sm:$0xff]
    %v753 = vld [vmem:[#allocation10 + $0x68] sm:$0xff]
    %v754 = vld [vmem:[#allocation10 + $0x70] sm:$0xff]
    %v755 = vld [vmem:[#allocation10 + $0x78] sm:$0xff]
    %v756 = vld [vmem:[%s6] sm:$0x1]
    %v758 = vlaneseq
    %v759 = vshrl.u32 %v758, 7
    %v760 = vsub.s32 0, %v759
    %v761 = vrot.slane %v756, %v760
    %763 = vmatprep.subr.mxu0 0.0
    %764 = vmatpush1.msra.mxu0 %v755
    %765 = vmatprep.subr.mxu0 0.0
    %766 = vmatpush1.msra.mxu0 %v754
    %767 = vmatprep.subr.mxu0 0.0
    %768 = vmatpush1.msra.mxu0 %v753
    %769 = vmatprep.subr.mxu0 0.0
    %770 = vmatpush1.msra.mxu0 %v752
    %771 = vmatprep.subr.mxu0 0.0
    %772 = vmatpush1.msra.mxu0 %v751
    %773 = vmatprep.subr.mxu0 0.0
    %774 = vmatpush1.msra.mxu0 %v750
    %775 = vmatprep.subr.mxu0 0.0
    %776 = vmatpush1.msra.mxu0 %v749
    %777 = vmatprep.subr.mxu0 0.0
    %778 = vmatpush1.msra.mxu0 %v748
    %779 = vmatprep.subr.mxu0 0.0
    %780 = vmatpush1.msra.mxu0 %v747
    %781 = vmatprep.subr.mxu0 0.0
    %782 = vmatpush1.msra.mxu0 %v746
    %783 = vmatprep.subr.mxu0 0.0
    %784 = vmatpush1.msra.mxu0 %v745
    %785 = vmatprep.subr.mxu0 0.0
    %786 = vmatpush1.msra.mxu0 %v744
    %787 = vmatprep.subr.mxu0 0.0
    %788 = vmatpush1.msra.mxu0 %v743
    %789 = vmatprep.subr.mxu0 0.0
    %790 = vmatpush1.msra.mxu0 %v742
    %791 = vmatprep.subr.mxu0 0.0
    %792 = vmatpush1.msra.mxu0 %v741
    %793 = vmatprep.subr.mxu0 0.0
    %794 = vmatpush1.msra.mxu0 %v740
    %795 = vmatprep.subr.mxu0 0.0
    %796 = vmatpush2.msra.mxu0 0.0
    %797 = vmatprep.subr.mxu0 0.0
    %798 = vmatpush2.msra.mxu0 0.0
    %799 = vmatprep.subr.mxu0 0.0
    %800 = vmatpush2.msra.mxu0 0.0
    %801 = vmatprep.subr.mxu0 0.0
    %802 = vmatpush2.msra.mxu0 0.0
    %803 = vmatprep.subr.mxu0 0.0
    %804 = vmatpush2.msra.mxu0 0.0
    %805 = vmatprep.subr.mxu0 0.0
    %806 = vmatpush2.msra.mxu0 0.0
    %807 = vmatprep.subr.mxu0 0.0
    %808 = vmatpush2.msra.mxu0 0.0
    %809 = vmatprep.subr.mxu0 0.0
    %810 = vmatpush2.msra.mxu0 0.0
    %811 = vmatprep.subr.mxu0 0.0
    %812 = vmatpush2.msra.mxu0 0.0
    %813 = vmatprep.subr.mxu0 0.0
    %814 = vmatpush2.msra.mxu0 0.0
    %815 = vmatprep.subr.mxu0 0.0
    %816 = vmatpush2.msra.mxu0 0.0
    %817 = vmatprep.subr.mxu0 0.0
    %818 = vmatpush2.msra.mxu0 0.0
    %819 = vmatprep.subr.mxu0 0.0
    %820 = vmatpush2.msra.mxu0 0.0
    %821 = vmatprep.subr.mxu0 0.0
    %822 = vmatpush2.msra.mxu0 0.0
    %823 = vmatprep.subr.mxu0 0.0
    %824 = vmatpush2.msra.mxu0 0.0
    %825 = vmatprep.subr.mxu0 0.0
    %826 = vmatpush2.msra.mxu0 0.0
    %827 = vmatprep.mubr.f32.mxu0 0.0
    %828 = vmatmul.mubr.f32.gmra.mxu0 %v732
    %v829 = vpop.f32.mrf.mxu0
    %v830 = vadd.f32 %v761, %v829
    %v831 = vpop.f32.mrf.mxu0
    %832 = vmatprep.mubr.f32.mxu0 0.0
    %833 = vmatmul.mubr.f32.gmra.mxu0 %v733
    %v834 = vpop.f32.mrf.mxu0
    %v835 = vadd.f32 %v761, %v834
    %v836 = vpop.f32.mrf.mxu0
    %837 = vmatprep.mubr.f32.mxu0 0.0
    %838 = vmatmul.mubr.f32.gmra.mxu0 %v734
    %v839 = vpop.f32.mrf.mxu0
    %v840 = vadd.f32 %v761, %v839
    %v841 = vpop.f32.mrf.mxu0
    %842 = vmatprep.mubr.f32.mxu0 0.0
    %843 = vmatmul.mubr.f32.gmra.mxu0 %v735
    %v844 = vpop.f32.mrf.mxu0
    %v845 = vadd.f32 %v761, %v844
    %v846 = vpop.f32.mrf.mxu0
    %847 = vmatprep.mubr.f32.mxu0 0.0
    %848 = vmatmul.mubr.f32.gmra.mxu0 %v736
    %v849 = vpop.f32.mrf.mxu0
    %v850 = vadd.f32 %v761, %v849
    %v851 = vpop.f32.mrf.mxu0
    %852 = vmatprep.mubr.f32.mxu0 0.0
    %853 = vmatmul.mubr.f32.gmra.mxu0 %v737
    %v854 = vpop.f32.mrf.mxu0
    %v855 = vadd.f32 %v761, %v854
    %v856 = vpop.f32.mrf.mxu0
    %857 = vmatprep.mubr.f32.mxu0 0.0
    %858 = vmatmul.mubr.f32.gmra.mxu0 %v738
    %v859 = vpop.f32.mrf.mxu0
    %v860 = vadd.f32 %v761, %v859
    %v861 = vpop.f32.mrf.mxu0
    %862 = vmatprep.mubr.f32.mxu0 0.0
    %863 = vmatmul.mubr.f32.gmra.mxu0 %v739
    %v864 = vpop.f32.mrf.mxu0
    %v865 = vadd.f32 %v761, %v864
    %v866 = vpop.f32.mrf.mxu0
    %867 = vdwg.mxu0
    %868 = vst [vmem:[#allocation11] sm:$0xff] %v830
    %869 = vst [vmem:[#allocation11 + $0x8] sm:$0xff] %v835
    %870 = vst [vmem:[#allocation11 + $0x10] sm:$0xff] %v840
    %871 = vst [vmem:[#allocation11 + $0x18] sm:$0xff] %v845
    %872 = vst [vmem:[#allocation11 + $0x20] sm:$0xff] %v850
    %873 = vst [vmem:[#allocation11 + $0x28] sm:$0xff] %v855
    %874 = vst [vmem:[#allocation11 + $0x30] sm:$0xff] %v860
    %875 = vst [vmem:[#allocation11 + $0x38] sm:$0xff] %v865
    // Predicated region
    $region46: #{tpu_custom_call.1} parent=1 // pred_check
      %p876 = pneg %p92
    $region47: #{tpu_custom_call.1} parent=1 // pred_check_branch
      %878 = sbr.rel (%p876) target = $region49
    $region48: #{tpu_custom_call.1} parent=1 // pred_region
      %879 = vst [vmem:[#allocation12] sm:$0xff] %v728
    $region49: #{tpu_custom_call.1} parent=1 // pred_fallthru
      _
    // Predicated region
    $region50: #{tpu_custom_call.1} parent=1 // pred_check
      _
    $region51: #{tpu_custom_call.1} parent=1 // pred_check_branch
      %881 = sbr.rel (0) target = $region53
    $region52: #{tpu_custom_call.1} parent=1 // pred_region
      %s883 = ssub.s32 1024, 1024
      %884 = vsyncadd [#allocation7], %s883
      %s885 = sshll.u32 [#allocation11], 4
      %s886 = int_to_ptr.vmem [resolvable:$true] %s885
      %891 = dma.vmem_to_hbm [thread:$0]  %s886, 1024, %s7, [#allocation7], 128, 128, 8
    $region53: #{tpu_custom_call.1} parent=1 // pred_fallthru
      _
    // Predicated region
    $region54: #{tpu_custom_call.1} parent=1 // pred_check
      _
    $region55: #{tpu_custom_call.1} parent=1 // pred_check_branch
      %893 = sbr.rel (0) target = $region57
    $region56: #{tpu_custom_call.1} parent=1 // pred_region
      %s895 = ssub.s32 128, 128
      %896 = vsyncadd [#allocation13], %s895
      %s898 = sshll.u32 [#allocation12], 4
      %s899 = int_to_ptr.vmem [resolvable:$true] %s898
      %901 = dma.vmem_to_hbm [thread:$0]  %s899, 128, %s8, [#allocation13]
    $region57: #{tpu_custom_call.1} parent=1 // pred_fallthru
      _
    // Predicated region
    $region58: #{tpu_custom_call.1} parent=1 // pred_check
      _
    $region59: #{tpu_custom_call.1} parent=1 // pred_check_branch
      %903 = sbr.rel (0) target = $region61
    $region60: #{tpu_custom_call.1} parent=1 // pred_region
      %904 = dma.done [#allocation7], 1024
    $region61: #{tpu_custom_call.1} parent=1 // pred_fallthru
      _
    // Predicated region
    $region62: #{tpu_custom_call.1} parent=1 // pred_check
      _
    $region63: #{tpu_custom_call.1} parent=1 // pred_check_branch
      %906 = sbr.rel (0) target = $region65
    $region64: #{tpu_custom_call.1} parent=1 // pred_region
      %907 = dma.done [#allocation13], 128
    $region65: #{tpu_custom_call.1} parent=1 // pred_fallthru
      _
    %908 = vsyncpa [#allocation6], 1
    %909 = vsyncpa [#allocation9], 1
    %910 = vsyncpa [#allocation7], 1
    %911 = vsyncpa [#allocation13], 1

</llo_original>
